<compile_context>
chip_gen: v5e
topology: v5e:2x2
jax: 0.10.0
libtpu: 0.0.40
codegen_flags: <defaults>
</compile_context>

<pallas_src>
import functools

import jax
import jax.numpy as jnp
from jax import lax
from jax.experimental import pallas as pl
from jax.experimental.pallas import tpu as pltpu

# Cross taps in (ky, kx) order, matching both the weight folding and the in-kernel slices:
# up, left, center, right, down.
_CROSS_TAPS = ((0, 1), (1, 0), (1, 1), (1, 2), (2, 1))


def _round_up(x, m):
    return ((x + m - 1) // m) * m


def _vmem_capacity_bytes():
    try:
        return int(pltpu.get_tpu_info().vmem_capacity_bytes)   # 64 MiB v7x, 128 MiB v5e/v6e
    except Exception:
        return 64 * 1024 * 1024                                # conservative fallback


def _est_vmem_bytes(t, w, cin, cout, kp, itemsize):
    """Rough VMEM footprint for pixel tile t: double-buffered blocks + in-kernel temps."""
    x_blk = cin * (t + 2 * w) * itemsize        # halo'd x window
    out_blk = cout * t * itemsize
    mask_blk = 2 * t * itemsize
    wgt_blk = cout * kp * itemsize              # resident weight (counted now)
    temps = kp * t * itemsize + cout * t * 4    # in-kernel xcat + f32 accumulator
    return 2 * (x_blk + out_blk + mask_blk + wgt_blk) + temps + (1 << 20)


def _choose_tile(hw, w, n, cin, cout, kp, itemsize, budget):
    """Pixel tile: multiple of 128, ~2 MiB of x per grid step, fits the VMEM budget,
    prefers exact divisors of H*W (no output pad/strip pass), keeps >= 2 grid steps."""
    t_hw = _round_up(max(hw, 128), 128)
    t_want = _round_up(max((2 << 20) // max(cin * itemsize, 1), 1), 128)
    t = min(t_hw, min(max(t_want, 512), 8192))
    while t > 128 and _est_vmem_bytes(t, w, cin, cout, kp, itemsize) > budget:
        t -= 128
    t = max(t, 128)

    def _best_divisor(limit):
        best, d = 0, 128
        while d <= min(limit, hw):
            if hw % d == 0:
                best = d
            d += 128
        return best

    div = _best_divisor(t)
    if div >= max(128, t // 2):
        t = div
    # keep at least 2 total grid steps so both v7x TensorCores get work (only bites if N == 1)
    if n * ((hw + t - 1) // t) < 2 and hw > 128 and t > 128:
        half = max(128, (t // 2 // 128) * 128)
        div = _best_divisor(half)
        t = div if div >= 128 else half
    return t


def _cross_conv_kernel(x_ref, w_ref, b_ref, m_ref, o_ref, *, w, t, cin, kp):
    # x_ref: (Cin, T + 2W)  halo'd window of the zero-padded flattened pixel axis
    # w_ref: (Cout, Kp)     b_ref: (Cout, 1) f32     m_ref: (2, T) column masks
    # o_ref: (Cout, T)
    xw = x_ref[...]
    ml = m_ref[0:1, :]                       # 0 where output column == 0   (left tap)
    mr = m_ref[1:2, :]                       # 0 where output column == W-1 (right tap)
    parts = [
        xw[:, 0:t],                          # up     (0,1): flat offset -W (zero pad handles y==0)
        xw[:, w - 1:w - 1 + t] * ml,         # left   (1,0): flat offset -1 (mask handles x==0)
        xw[:, w:w + t],                      # center (1,1)
        xw[:, w + 1:w + 1 + t] * mr,         # right  (1,2): flat offset +1 (mask handles x==W-1)
        xw[:, 2 * w:2 * w + t],              # down   (2,1): flat offset +W (zero pad handles y==H-1)
    ]
    if kp > 5 * cin:                         # sublane-pad the contraction axis with zero rows
        parts.append(jnp.zeros((kp - 5 * cin, t), dtype=xw.dtype))
    xcat = jnp.concatenate(parts, axis=0)                                    # (Kp, T)
    acc = jnp.dot(w_ref[...], xcat, preferred_element_type=jnp.float32)      # (Cout, T) f32
    o_ref[...] = (acc + b_ref[...]).astype(o_ref.dtype)


@jax.jit
def cross_conv_v1(x_nchw, weight, bias, weight_mask):
    """Forward of CrossConvV1: masked 3x3 conv, stride=1, padding=1, NCHW in/out."""
    wgt = weight * weight_mask                    # forward re-applies the mask
    n, cin, h, w = x_nchw.shape
    cout = wgt.shape[0]
    hw = h * w
    dtype = x_nchw.dtype
    itemsize = jnp.dtype(dtype).itemsize

    sublane = 8 * (4 // itemsize)                 # 8 (f32) / 16 (bf16) / 32 (int8)
    kp = _round_up(5 * cin, sublane)

    vmem_cap = _vmem_capacity_bytes()
    t = _choose_tile(hw, w, n, cin, cout, kp, itemsize, int(0.45 * vmem_cap))
    n_tiles = (hw + t - 1) // t
    hw_pad = n_tiles * t

    # ---- glue: zero-pad the flattened pixel axis by W on each side (rows above/below)
    #      and re-tile into overlapping windows of T + 2W pixels (single extra x pass) ----
    x_flat = x_nchw.reshape(n, cin, hw)
    x_pad = jnp.pad(x_flat, ((0, 0), (0, 0), (w, w + hw_pad - hw)))          # (N, Cin, HWp+2W)
    if n_tiles == 1:
        x_tiles = x_pad[:, None]                                             # (N, 1, Cin, T+2W)
    else:
        x_tiles = jnp.stack(
            [lax.slice_in_dim(x_pad, j * t, j * t + t + 2 * w, axis=2)
             for j in range(n_tiles)], axis=1)                               # (N, nt, Cin, T+2W)

    # folded cross weights (Cout, Kp), f32 bias, and column-boundary masks (2, HW_pad)
    w_cat = jnp.concatenate([wgt[:, :, ky, kx] for ky, kx in _CROSS_TAPS], axis=1)
    if kp > 5 * cin:
        w_cat = jnp.pad(w_cat, ((0, 0), (0, kp - 5 * cin)))
    b2 = bias.reshape(cout, 1).astype(jnp.float32)
    col = jnp.arange(hw_pad, dtype=jnp.int32) % w
    masks = jnp.stack([(col != 0), (col != w - 1)], axis=0).astype(dtype)

    grid = (n, n_tiles)
    cost = pl.CostEstimate(
        flops=2 * n * hw_pad * kp * cout,
        transcendentals=0,
        bytes_accessed=(x_tiles.size + w_cat.size + masks.size
                        + n * cout * hw_pad) * itemsize + b2.size * 4,
    )

    kernel = functools.partial(_cross_conv_kernel, w=w, t=t, cin=cin, kp=kp)
    out = pl.pallas_call(
        kernel,
        out_shape=jax.ShapeDtypeStruct((n, cout, hw_pad), dtype),
        grid=grid,
        in_specs=[
            pl.BlockSpec((None, None, cin, t + 2 * w), lambda i, j: (i, j, 0, 0)),
            pl.BlockSpec((cout, kp), lambda i, j: (0, 0)),
            pl.BlockSpec((cout, 1), lambda i, j: (0, 0)),
            pl.BlockSpec((2, t), lambda i, j: (0, j)),
        ],
        out_specs=pl.BlockSpec((None, cout, t), lambda i, j: (i, 0, j)),
        compiler_params=pltpu.CompilerParams(
            dimension_semantics=("parallel", "parallel"),
            vmem_limit_bytes=int(0.85 * vmem_cap)),
        cost_estimate=cost,
    )(x_tiles, w_cat, b2, masks)

    out = out if hw_pad == hw else out[:, :, :hw]
    return out.reshape(n, cout, h, w)


def _reference(x_nchw, weight, bias, weight_mask):
    wgt = weight * weight_mask
    out = lax.conv_general_dilated(
        x_nchw, wgt, window_strides=(1, 1), padding=((1, 1), (1, 1)),
        dimension_numbers=("NCHW", "OIHW", "NCHW"))
    return out + bias.reshape(1, -1, 1, 1)


if __name__ == "__main__":
    key = jax.random.PRNGKey(0)
    k_x, k_w, k_b = jax.random.split(key, 3)

    N, Cin, H, W = 2, 4, 16, 16
    Cout = 4                                     # must be even (module asserts)

    x = jax.random.normal(k_x, (N, Cin, H, W), dtype=jnp.float32)

    # Conv2d(in, out, 3, stride=1, padding=1) params, deterministic init:
    # kaiming_normal_(mode='fan_out', nonlinearity='relu'): std = sqrt(2 / (Cout*3*3))
    fan_out = Cout * 3 * 3
    weight = jax.random.normal(k_w, (Cout, Cin, 3, 3), dtype=jnp.float32) * jnp.sqrt(2.0 / fan_out)
    # default Conv2d bias init: U(-1/sqrt(fan_in), 1/sqrt(fan_in)), fan_in = Cin*3*3
    bound = 1.0 / jnp.sqrt(Cin * 3.0 * 3.0)
    bias = jax.random.uniform(k_b, (Cout,), dtype=jnp.float32, minval=-bound, maxval=bound)

    # weight_mask buffer: ones with the four 3x3 corners zeroed
    weight_mask = jnp.ones((Cout, Cin, 3, 3), dtype=jnp.float32)
    for (cy, cx) in ((0, 0), (0, 2), (2, 0), (2, 2)):
        weight_mask = weight_mask.at[:, :, cy, cx].set(0.0)
    weight = weight * weight_mask               # __init__ applies the mask once too

    out = jax.block_until_ready(cross_conv_v1(x, weight, bias, weight_mask))
    ref = jax.block_until_ready(_reference(x, weight, bias, weight_mask))

    assert out.shape == (N, Cout, H, W), out.shape
    assert jnp.allclose(out, ref, atol=1e-5, rtol=1e-5), float(jnp.max(jnp.abs(out - ref)))

    print("KERNEL_OK")
</pallas_src>

<mosaic_0001>
module attributes {stable_mosaic.version = 11 : i64} {
  func.func @_cross_conv_kernel(%arg0: i32, %arg1: i32, %arg2: memref<1x1x4x288xf32, #tpu.memory_space<vmem>>, %arg3: memref<4x24xf32, #tpu.memory_space<vmem>>, %arg4: memref<4x1xf32, #tpu.memory_space<vmem>>, %arg5: memref<2x256xf32, #tpu.memory_space<vmem>>, %arg6: memref<1x4x256xf32, #tpu.memory_space<vmem>>) attributes {dimension_semantics = [#tpu.dimension_semantics<parallel>, #tpu.dimension_semantics<parallel>], iteration_bounds = array<i64: 2, 1>, scalar_prefetch = 0 : i64, scratch_operands = 0 : i64, tpu.core_type = #tpu.core_type<tc>, window_params = [{transform_indices = @transform_0, window_bounds = array<i64: 1, 1, 4, 288>}, {pipeline_mode = #tpu.pipeline_mode<synchronous>, transform_indices = @transform_1, window_bounds = array<i64: 4, 24>}, {pipeline_mode = #tpu.pipeline_mode<synchronous>, transform_indices = @transform_2, window_bounds = array<i64: 4, 1>}, {transform_indices = @transform_3, window_bounds = array<i64: 2, 256>}, {transform_indices = @transform_4, window_bounds = array<i64: 1, 4, 256>}]} {
    %c0 = arith.constant 0 : index
    %c0_0 = arith.constant 0 : index
    %c0_1 = arith.constant 0 : index
    %c0_2 = arith.constant 0 : index
    %0 = vector.load %arg2[%c0, %c0_0, %c0_1, %c0_2] : memref<1x1x4x288xf32, #tpu.memory_space<vmem>>, vector<1x1x4x288xf32>
    %1 = vector.shape_cast %0 : vector<1x1x4x288xf32> to vector<4x288xf32>
    %c0_3 = arith.constant 0 : index
    %c0_4 = arith.constant 0 : index
    %2 = vector.load %arg5[%c0_3, %c0_4] : memref<2x256xf32, #tpu.memory_space<vmem>>, vector<1x256xf32>
    %c1 = arith.constant 1 : index
    %c0_5 = arith.constant 0 : index
    %3 = vector.load %arg5[%c1, %c0_5] : memref<2x256xf32, #tpu.memory_space<vmem>>, vector<1x256xf32>
    %4 = vector.extract_strided_slice %1 {offsets = [0, 0], sizes = [4, 256], strides = [1, 1]} : vector<4x288xf32> to vector<4x256xf32>
    %5 = vector.extract_strided_slice %1 {offsets = [0, 15], sizes = [4, 256], strides = [1, 1]} : vector<4x288xf32> to vector<4x256xf32>
    %6 = vector.broadcast %2 : vector<1x256xf32> to vector<4x256xf32>
    %7 = arith.mulf %5, %6 : vector<4x256xf32>
    %8 = vector.extract_strided_slice %1 {offsets = [0, 16], sizes = [4, 256], strides = [1, 1]} : vector<4x288xf32> to vector<4x256xf32>
    %9 = vector.extract_strided_slice %1 {offsets = [0, 17], sizes = [4, 256], strides = [1, 1]} : vector<4x288xf32> to vector<4x256xf32>
    %10 = vector.broadcast %3 : vector<1x256xf32> to vector<4x256xf32>
    %11 = arith.mulf %9, %10 : vector<4x256xf32>
    %12 = vector.extract_strided_slice %1 {offsets = [0, 32], sizes = [4, 256], strides = [1, 1]} : vector<4x288xf32> to vector<4x256xf32>
    %cst = arith.constant 0.000000e+00 : f32
    %13 = vector.broadcast %cst : f32 to vector<4x256xf32>
    %14 = tpu.concatenate %4, %7, %8, %11, %12, %13 in 0 : vector<4x256xf32>, vector<4x256xf32>, vector<4x256xf32>, vector<4x256xf32>, vector<4x256xf32>, vector<4x256xf32> -> vector<24x256xf32>
    %c0_6 = arith.constant 0 : index
    %c0_7 = arith.constant 0 : index
    %15 = vector.load %arg3[%c0_6, %c0_7] : memref<4x24xf32, #tpu.memory_space<vmem>>, vector<4x24xf32>
    %cst_8 = arith.constant dense<0.000000e+00> : vector<4x256xf32>
    %16 = tpu.matmul %15, %14, %cst_8 {dimension_numbers = #tpu.dot_dimension_numbers<[1], [0], [0], [1], [0, 0, 1, 1], [], []>} : vector<4x24xf32>, vector<24x256xf32>, vector<4x256xf32> -> vector<4x256xf32>
    %c0_9 = arith.constant 0 : index
    %c0_10 = arith.constant 0 : index
    %17 = vector.load %arg4[%c0_9, %c0_10] : memref<4x1xf32, #tpu.memory_space<vmem>>, vector<4x1xf32>
    %18 = vector.broadcast %17 : vector<4x1xf32> to vector<4x256xf32>
    %19 = arith.addf %16, %18 : vector<4x256xf32>
    %c0_11 = arith.constant 0 : index
    %c0_12 = arith.constant 0 : index
    %c0_13 = arith.constant 0 : index
    %20 = vector.load %arg6[%c0_11, %c0_12, %c0_13] : memref<1x4x256xf32, #tpu.memory_space<vmem>>, vector<1x4x256xf32>
    %21 = vector.shape_cast %20 : vector<1x4x256xf32> to vector<4x256xf32>
    %22 = vector.shape_cast %19 : vector<4x256xf32> to vector<1x4x256xf32>
    tpu.vector_store %arg6[%c0_11, %c0_12, %c0_13], %22 {strides = array<i32>} : memref<1x4x256xf32, #tpu.memory_space<vmem>>, vector<1x4x256xf32>,
    return
  }
  func.func @transform_0(%arg0: i32, %arg1: i32) -> (i32, i32, i32, i32) {
    %c0_i32 = arith.constant 0 : i32
    %c0_i32_0 = arith.constant 0 : i32
    %c0_i32_1 = arith.constant 0 : i32
    return %arg0, %arg1, %c0_i32, %c0_i32_0 : i32, i32, i32, i32
  }
  func.func @transform_1(%arg0: i32, %arg1: i32) -> (i32, i32) {
    %c0_i32 = arith.constant 0 : i32
    %c0_i32_0 = arith.constant 0 : i32
    %c0_i32_1 = arith.constant 0 : i32
    return %c0_i32, %c0_i32_0 : i32, i32
  }
  func.func @transform_2(%arg0: i32, %arg1: i32) -> (i32, i32) {
    %c0_i32 = arith.constant 0 : i32
    %c0_i32_0 = arith.constant 0 : i32
    %c0_i32_1 = arith.constant 0 : i32
    return %c0_i32, %c0_i32_0 : i32, i32
  }
  func.func @transform_3(%arg0: i32, %arg1: i32) -> (i32, i32) {
    %c0_i32 = arith.constant 0 : i32
    %c0_i32_0 = arith.constant 0 : i32
    return %c0_i32, %arg1 : i32, i32
  }
  func.func @transform_4(%arg0: i32, %arg1: i32) -> (i32, i32, i32) {
    %c0_i32 = arith.constant 0 : i32
    %c0_i32_0 = arith.constant 0 : i32
    return %arg0, %c0_i32, %arg1 : i32, i32, i32
  }
}

</mosaic_0001>

<llo_original>
// kernel: mul.1
$region0: #{mul.1}
  #allocation0 [shape = 's32[1]{0}', space=sflag, size = 0x4, scoped, tag = 'scoped memory for mul.1']
  %s0 = inlined_call_operand.vmem [shape: f32[4,4,3,3], index: 0, kind: input, shape index: {}]
  %s1 = inlined_call_operand.vmem [shape: f32[4,4,3,3], index: 1, kind: input, shape index: {}]
  %s2 = inlined_call_operand.vmem [shape: f32[4,4,3,3], index: 2, kind: output, shape index: {}]
  %v3 = vld [vmem:[%s0] sm:$0xf]
  %v4 = vld [vmem:[%s1] sm:$0xf]
  %5 = xla_tuple %v3, %v4
  %6 = xla_tuple %5
  %v7 = vmul.f32 %v3, %v4
  %8 = xla_tuple %v7
  %9 = vst [vmem:[%s2] sm:$0xf] %v7
  %s10 = scalar_lea.vmem %s0, 12
  %v11 = vld [vmem:[%s10] sm:$0xf]
  %s12 = scalar_lea.vmem %s1, 12
  %v13 = vld [vmem:[%s12] sm:$0xf]
  %14 = xla_tuple %v11, %v13
  %15 = xla_tuple %14
  %v16 = vmul.f32 %v11, %v13
  %17 = xla_tuple %v16
  %s18 = scalar_lea.vmem %s2, 12
  %19 = vst [vmem:[%s18] sm:$0xf] %v16
  %s20 = scalar_lea.vmem %s0, 24
  %v21 = vld [vmem:[%s20] sm:$0xf]
  %s22 = scalar_lea.vmem %s1, 24
  %v23 = vld [vmem:[%s22] sm:$0xf]
  %24 = xla_tuple %v21, %v23
  %25 = xla_tuple %24
  %v26 = vmul.f32 %v21, %v23
  %27 = xla_tuple %v26
  %s28 = scalar_lea.vmem %s2, 24
  %29 = vst [vmem:[%s28] sm:$0xf] %v26
  %s30 = scalar_lea.vmem %s0, 4
  %v31 = vld [vmem:[%s30] sm:$0xf]
  %s32 = scalar_lea.vmem %s1, 4
  %v33 = vld [vmem:[%s32] sm:$0xf]
  %34 = xla_tuple %v31, %v33
  %35 = xla_tuple %34
  %v36 = vmul.f32 %v31, %v33
  %37 = xla_tuple %v36
  %s38 = scalar_lea.vmem %s2, 4
  %39 = vst [vmem:[%s38] sm:$0xf] %v36
  %s40 = scalar_lea.vmem %s0, 16
  %v41 = vld [vmem:[%s40] sm:$0xf]
  %s42 = scalar_lea.vmem %s1, 16
  %v43 = vld [vmem:[%s42] sm:$0xf]
  %44 = xla_tuple %v41, %v43
  %45 = xla_tuple %44
  %v46 = vmul.f32 %v41, %v43
  %47 = xla_tuple %v46
  %s48 = scalar_lea.vmem %s2, 16
  %49 = vst [vmem:[%s48] sm:$0xf] %v46
  %s50 = scalar_lea.vmem %s0, 28
  %v51 = vld [vmem:[%s50] sm:$0xf]
  %s52 = scalar_lea.vmem %s1, 28
  %v53 = vld [vmem:[%s52] sm:$0xf]
  %54 = xla_tuple %v51, %v53
  %55 = xla_tuple %54
  %v56 = vmul.f32 %v51, %v53
  %57 = xla_tuple %v56
  %s58 = scalar_lea.vmem %s2, 28
  %59 = vst [vmem:[%s58] sm:$0xf] %v56
  %s60 = scalar_lea.vmem %s0, 8
  %v61 = vld [vmem:[%s60] sm:$0xf]
  %s62 = scalar_lea.vmem %s1, 8
  %v63 = vld [vmem:[%s62] sm:$0xf]
  %64 = xla_tuple %v61, %v63
  %65 = xla_tuple %64
  %v66 = vmul.f32 %v61, %v63
  %67 = xla_tuple %v66
  %s68 = scalar_lea.vmem %s2, 8
  %69 = vst [vmem:[%s68] sm:$0xf] %v66
  %s70 = scalar_lea.vmem %s0, 20
  %v71 = vld [vmem:[%s70] sm:$0xf]
  %s72 = scalar_lea.vmem %s1, 20
  %v73 = vld [vmem:[%s72] sm:$0xf]
  %74 = xla_tuple %v71, %v73
  %75 = xla_tuple %74
  %v76 = vmul.f32 %v71, %v73
  %77 = xla_tuple %v76
  %s78 = scalar_lea.vmem %s2, 20
  %79 = vst [vmem:[%s78] sm:$0xf] %v76
  %s80 = scalar_lea.vmem %s0, 32
  %v81 = vld [vmem:[%s80] sm:$0xf]
  %s82 = scalar_lea.vmem %s1, 32
  %v83 = vld [vmem:[%s82] sm:$0xf]
  %84 = xla_tuple %v81, %v83
  %85 = xla_tuple %84
  %v86 = vmul.f32 %v81, %v83
  %87 = xla_tuple %v86
  %s88 = scalar_lea.vmem %s2, 32
  %89 = vst [vmem:[%s88] sm:$0xf] %v86

// kernel: cross_conv_v1.1
$region0: #{cross_conv_v1.1}
  #allocation0 [shape = 'u32[]', space=smem, size = 0x4, offset = 0x4, fixed_abs, tag = 'smem constant byte address 0x4 - core index']
  #allocation1 [shape = 'u32[72,128]{1,0:T(1,128)}', space=vmem, size = 0x9000, scoped, tag = 'internal scratch']
  %s0 = inlined_call_operand.vmem [shape: f32[2,1,4,288], index: 0, kind: input, shape index: {}]
  %s1 = inlined_call_operand.vmem [shape: f32[4,24], index: 1, kind: input, shape index: {}]
  %s2 = inlined_call_operand.vmem [shape: f32[4,1], index: 2, kind: input, shape index: {}]
  %s3 = inlined_call_operand.vmem [shape: f32[2,256], index: 3, kind: input, shape index: {}]
  %s4 = inlined_call_operand.vmem [shape: f32[2,4,256], index: 4, kind: output, shape index: {}]
  %s5 = sld [smem:[#allocation0]]
  $region49: #{cross_conv_v1.1} parent=0
    _
  %s7 = ssub.s32 1, %s5
  %s8 = scalar_select 0, %s7, %s5
  loop: start=0, step=1, limit=4
  $region2: #{cross_conv_v1.1} parent=0 // loop_pre_header
    _
  $region3: #{cross_conv_v1.1} parent=0 // loop_header
    %s10 = sphi 0, %s14
    %p11 = scmp.ge.s32.totalorder %s10, 4
    %s17 = sphi 0, %s29
    %s18 = sphi 0, %s25
    %s19 = sphi 0, %s17
    %s20 = sphi 0, %s18
    %s21 = sphi 0, %s19
    %s22 = sphi 0, %s20
    %s34 = sphi 0, %s36
    %s37 = sphi 0, %s34
    %s38 = sphi 0, %s37
    %s54 = sphi 0, %s38
    %s58 = sphi 0, %s58
    %s60 = sphi 0, %s58
    %s61 = sphi 0, %s60
    %s75 = sphi 0, %s61
    %s79 = sphi 0, %s79
    %s81 = sphi 0, %s79
    %s82 = sphi 0, %s81
    %s96 = sphi 0, %s82
    %s102 = sphi 0, %s104
    %s105 = sphi 0, %s102
    %s106 = sphi 0, %s105
    %s122 = sphi 0, %s106
    %s130 = sphi 0, %s132
    %s133 = sphi 0, %s130
    %s134 = sphi 0, %s133
    %s150 = sphi 0, %s134
  $region4: #{cross_conv_v1.1} parent=0 // loop_header_branch
    %13 = sbr.rel (%p11) target = $region8
  $region5: #{cross_conv_v1.1} parent=0 // loop_body
    %s15 = ssub.s32 %s10, 1
    %s16 = ssub.s32 %s10, 2
    %s23 = sadd.s32 1, %s18
    %p24 = scmp.ge.s32.totalorder %s23, 1
    %s25 = scalar_select %p24, 0, %s23
    %s26 = sadd.s32 1, %s17
    %s27 = scalar_select %p24, %s26, %s17
    %p28 = scmp.ge.s32.totalorder %s27, 2
    %s29 = scalar_select %p28, 0, %s27
    %s30 = ssub.s32 %s17, %s29
    %s31 = ssub.s32 %s18, %s25
    %s32 = sor.u32 %s30, %s31
    %p33 = scmp.eq.s32.totalorder %s32, 0
    %s35 = sadd.s32 %s34, 1
    %s36 = scalar_select %p33, %s34, %s35
    %p39 = pneg %p33
    %p40 = scmp.eq.s32.totalorder %s10, 1
    %p41 = por %p39, %p40
    %p42 = scmp.ne.s32.totalorder %s34, %s37
    %p43 = scmp.eq.s32.totalorder %s10, 0
    %p44 = por %p42, %p43
    %p45 = scmp.ne.s32.totalorder %s34, %s37
    %p46 = scmp.eq.s32.totalorder %s15, 1
    %p47 = por %p45, %p46
    %p48 = scmp.ne.s32.totalorder %s37, %s38
    %p49 = scmp.eq.s32.totalorder %s15, 0
    %p50 = por %p48, %p49
    %p51 = scmp.ne.s32.totalorder %s37, %s38
    %p52 = scmp.eq.s32.totalorder %s16, 1
    %p53 = por %p51, %p52
    %p55 = scmp.ne.s32.totalorder %s38, %s54
    %p56 = scmp.eq.s32.totalorder %s16, 0
    %p57 = por %p55, %p56
    %s59 = sadd.s32 %s58, 1
    %p62 = scmp.eq.s32.totalorder %s10, 1
    %p63 = scmp.ne.s32.totalorder %s58, %s60
    %p64 = scmp.eq.s32.totalorder %s10, 0
    %p65 = por %p63, %p64
    %p66 = scmp.ne.s32.totalorder %s58, %s60
    %p67 = scmp.eq.s32.totalorder %s15, 1
    %p68 = por %p66, %p67
    %p69 = scmp.ne.s32.totalorder %s60, %s61
    %p70 = scmp.eq.s32.totalorder %s15, 0
    %p71 = por %p69, %p70
    %p72 = scmp.ne.s32.totalorder %s60, %s61
    %p73 = scmp.eq.s32.totalorder %s16, 1
    %p74 = por %p72, %p73
    %p76 = scmp.ne.s32.totalorder %s61, %s75
    %p77 = scmp.eq.s32.totalorder %s16, 0
    %p78 = por %p76, %p77
    %s80 = sadd.s32 %s79, 1
    %p83 = scmp.eq.s32.totalorder %s10, 1
    %p84 = scmp.ne.s32.totalorder %s79, %s81
    %p85 = scmp.eq.s32.totalorder %s10, 0
    %p86 = por %p84, %p85
    %p87 = scmp.ne.s32.totalorder %s79, %s81
    %p88 = scmp.eq.s32.totalorder %s15, 1
    %p89 = por %p87, %p88
    %p90 = scmp.ne.s32.totalorder %s81, %s82
    %p91 = scmp.eq.s32.totalorder %s15, 0
    %p92 = por %p90, %p91
    %p93 = scmp.ne.s32.totalorder %s81, %s82
    %p94 = scmp.eq.s32.totalorder %s16, 1
    %p95 = por %p93, %p94
    %p97 = scmp.ne.s32.totalorder %s82, %s96
    %p98 = scmp.eq.s32.totalorder %s16, 0
    %p99 = por %p97, %p98
    %s100 = ssub.s32 %s18, %s25
    %p101 = scmp.eq.s32.totalorder %s100, 0
    %s103 = sadd.s32 %s102, 1
    %s104 = scalar_select %p101, %s102, %s103
    %p107 = pneg %p101
    %p108 = scmp.eq.s32.totalorder %s10, 1
    %p109 = por %p107, %p108
    %p110 = scmp.ne.s32.totalorder %s102, %s105
    %p111 = scmp.eq.s32.totalorder %s10, 0
    %p112 = por %p110, %p111
    %p113 = scmp.ne.s32.totalorder %s102, %s105
    %p114 = scmp.eq.s32.totalorder %s15, 1
    %p115 = por %p113, %p114
    %p116 = scmp.ne.s32.totalorder %s105, %s106
    %p117 = scmp.eq.s32.totalorder %s15, 0
    %p118 = por %p116, %p117
    %p119 = scmp.ne.s32.totalorder %s105, %s106
    %p120 = scmp.eq.s32.totalorder %s16, 1
    %p121 = por %p119, %p120
    %p123 = scmp.ne.s32.totalorder %s106, %s122
    %p124 = scmp.eq.s32.totalorder %s16, 0
    %p125 = por %p123, %p124
    %s126 = ssub.s32 %s17, %s29
    %s127 = ssub.s32 %s18, %s25
    %s128 = sor.u32 %s126, %s127
    %p129 = scmp.eq.s32.totalorder %s128, 0
    %s131 = sadd.s32 %s130, 1
    %s132 = scalar_select %p129, %s130, %s131
    %p135 = pneg %p129
    %p136 = scmp.eq.s32.totalorder %s10, 1
    %p137 = por %p135, %p136
    %p138 = scmp.ne.s32.totalorder %s130, %s133
    %p139 = scmp.eq.s32.totalorder %s10, 0
    %p140 = por %p138, %p139
    %p141 = scmp.ne.s32.totalorder %s130, %s133
    %p142 = scmp.eq.s32.totalorder %s15, 1
    %p143 = por %p141, %p142
    %p144 = scmp.ne.s32.totalorder %s133, %s134
    %p145 = scmp.eq.s32.totalorder %s15, 0
    %p146 = por %p144, %p145
    %p147 = scmp.ne.s32.totalorder %s133, %s134
    %p148 = scmp.eq.s32.totalorder %s16, 1
    %p149 = por %p147, %p148
    %p151 = scmp.ne.s32.totalorder %s134, %s150
    %p152 = scmp.eq.s32.totalorder %s16, 0
    %p153 = por %p151, %p152
    %p154 = scmp.le.s32.totalorder 1, %s10
    %p155 = scmp.lt.s32.totalorder %s10, 3
    %p156 = pnand %p154, %p155
    %p157 = pneg %p156
    // Predicated region
    $region9: #{cross_conv_v1.1} parent=5 // pred_check
      _
    $region10: #{cross_conv_v1.1} parent=5 // pred_check_branch
      %159 = sbr.rel (%p156) target = $region12
    $region11: #{cross_conv_v1.1} parent=5 // pred_region
      %s160 = ssub.s32 %s10, 1
      // Predicated region
      $region13: #{cross_conv_v1.1} parent=11 // pred_check
        %p161 = pneg %p71
      $region14: #{cross_conv_v1.1} parent=11 // pred_check_branch
        %163 = sbr.rel (%p161) target = $region16
      $region15: #{cross_conv_v1.1} parent=11 // pred_region
        _
      $region16: #{cross_conv_v1.1} parent=11 // pred_fallthru
        _
      // Predicated region
      $region17: #{cross_conv_v1.1} parent=11 // pred_check
        %p164 = pneg %p92
      $region18: #{cross_conv_v1.1} parent=11 // pred_check_branch
        %166 = sbr.rel (%p164) target = $region20
      $region19: #{cross_conv_v1.1} parent=11 // pred_region
        _
      $region20: #{cross_conv_v1.1} parent=11 // pred_fallthru
        _
      // Predicated region
      $region21: #{cross_conv_v1.1} parent=11 // pred_check
        %p167 = pneg %p118
      $region22: #{cross_conv_v1.1} parent=11 // pred_check_branch
        %169 = sbr.rel (%p167) target = $region24
      $region23: #{cross_conv_v1.1} parent=11 // pred_region
        %s170 = smul.u32 2, %s20
        %p171 = scmp.lt.s32.totalorder %s170, 1
        %s172 = scalar_select %p171, %s170, 1
        %s173 = smul.addr %s172, 2
        %s174 = scalar_lea.vmem %s3, %s173
        %s175 = smul.u32 2, %s20
      $region24: #{cross_conv_v1.1} parent=11 // pred_fallthru
        _
    $region12: #{cross_conv_v1.1} parent=5 // pred_fallthru
      _
    %p176 = scmp.lt.s32.totalorder %s10, 2
    // Predicated region
    $region25: #{cross_conv_v1.1} parent=5 // pred_check
      %p177 = pneg %p176
    $region26: #{cross_conv_v1.1} parent=5 // pred_check_branch
      %179 = sbr.rel (%p177) target = $region28
    $region27: #{cross_conv_v1.1} parent=5 // pred_region
      // Predicated region
      $region29: #{cross_conv_v1.1} parent=27 // pred_check
        %p180 = pneg %p44
      $region30: #{cross_conv_v1.1} parent=27 // pred_check_branch
        %182 = sbr.rel (%p180) target = $region32
      $region31: #{cross_conv_v1.1} parent=27 // pred_region
        %p183 = scmp.lt.s32.totalorder %s17, 1
        %s184 = scalar_select %p183, %s17, 1
        %p185 = scmp.lt.s32.totalorder %s18, 0
        %s186 = scalar_select %p185, %s18, 0
        %s187 = smul.addr %s186, 3
        %s188 = smul.addr %s184, 3
        %s189 = sadd.s32 %s187, %s188
        %s190 = smul.addr %s189, 4
        %s191 = scalar_lea.vmem %s0, %s190
      $region32: #{cross_conv_v1.1} parent=27 // pred_fallthru
        _
    $region28: #{cross_conv_v1.1} parent=5 // pred_fallthru
      _
    %p192 = scmp.le.s32.totalorder 1, %s10
    %p193 = scmp.lt.s32.totalorder %s10, 3
    %p194 = pnand %p192, %p193
    %p195 = pneg %p194
    // Predicated region
    $region33: #{cross_conv_v1.1} parent=5 // pred_check
      _
    $region34: #{cross_conv_v1.1} parent=5 // pred_check_branch
      %197 = sbr.rel (%p194) target = $region36
    $region35: #{cross_conv_v1.1} parent=5 // pred_region
      %s198 = ssub.s32 %s10, 1
      %p199 = scmp.lt.s32.totalorder %s19, 1
      %s200 = scalar_select %p199, %s19, 1
      %p201 = scmp.lt.s32.totalorder %s20, 0
      %s202 = scalar_select %p201, %s20, 0
      %s203 = smul.addr %s202, 3
      %s204 = smul.addr %s200, 3
      %s205 = sadd.s32 %s203, %s204
      %s206 = smul.addr %s205, 4
      %s207 = scalar_lea.vmem %s0, %s206
      %p208 = pneg %p50
      %p209 = pneg %p47
      %p210 = pneg %p71
      %p211 = pneg %p68
      %p212 = pneg %p92
      %p213 = pneg %p89
      %s214 = smul.u32 2, %s20
      %p215 = scmp.lt.s32.totalorder %s214, 1
      %s216 = scalar_select %p215, %s214, 1
      %s217 = smul.addr %s216, 2
      %s218 = scalar_lea.vmem %s3, %s217
      %p219 = pneg %p118
      %p220 = pneg %p115
      %p221 = pneg %p146
      %p222 = pneg %p143
      %s223 = smul.u32 2, %s20
      %p224 = scmp.lt.s32.totalorder %s19, 1
      %s225 = scalar_select %p224, %s19, 1
      %p226 = scmp.lt.s32.totalorder %s223, 1
      %s227 = scalar_select %p226, %s223, 1
      %s228 = smul.addr %s225, 2
      %s229 = sadd.s32 %s227, %s228
      %s230 = smul.addr %s229, 4
      %s231 = scalar_lea.vmem %s4, %s230
      %p232 = scmp.lt.s32.totalorder %s19, 1
      %s233 = scalar_select %p232, %s19, 1
      %p234 = scmp.lt.s32.totalorder %s20, 0
      %s235 = scalar_select %p234, %s20, 0
      %s236 = smul.addr %s235, 3
      %s237 = smul.addr %s233, 3
      %s238 = sadd.s32 %s236, %s237
      %s239 = smul.addr %s238, 4
      %s240 = scalar_lea.vmem %s0, %s239
      %s241 = smul.u32 2, %s20
      %p242 = scmp.lt.s32.totalorder %s241, 1
      %s243 = scalar_select %p242, %s241, 1
      %s244 = smul.addr %s243, 2
      %s245 = scalar_lea.vmem %s3, %s244
      %s246 = smul.u32 2, %s20
      %s247 = smul.u32 2, %s20
      %p248 = scmp.lt.s32.totalorder %s19, 1
      %s249 = scalar_select %p248, %s19, 1
      %p250 = scmp.lt.s32.totalorder %s247, 1
      %s251 = scalar_select %p250, %s247, 1
      %s252 = smul.addr %s249, 2
      %s253 = sadd.s32 %s251, %s252
      %s254 = smul.addr %s253, 4
      %s255 = scalar_lea.vmem %s4, %s254
      %s256 = smul.u32 2, %s20
      %v257 = vld [vmem:[%s240] sm:$0xff]
      %v258 = vld [vmem:[%s240 + $0x8] sm:$0xf]
      %v259 = vld [vmem:[%s245] ss:$2 sm:$0x3]
      %s260 = scalar_lea.vmem %s245, 1
      %v261 = vld [vmem:[%s260] ss:$2 sm:$0x3]
      %v263 = vperm.slane %v259, 0
      %v264 = vperm.slane %v259, 1
      %v265 = vrot.slane %v264, 4
      %vm266 = vcmask 1043456
      %v267 = vsel %vm266, %v263, %v265
      %268 = vrot.lane.b32.xlu0 %v267, 15
      %v269 = vpop.permute.xlu0 %268
      %v270 = vrot.slane %v269, 4
      %vm271 = vcmask 121856
      %v272 = vsel %vm271, %v270, %v269
      %v275 = vmul.f32 %v257, %v272
      %v276 = vmul.f32 %v258, %v270
      %v278 = vperm.slane %v261, 0
      %v279 = vperm.slane %v261, 1
      %v280 = vrot.slane %v279, 4
      %v281 = vsel %vm266, %v278, %v280
      %282 = vrot.lane.b32.xlu0 %v281, 17
      %v283 = vpop.permute.xlu0 %282
      %v284 = vrot.slane %v283, 4
      %vm285 = vcmask 138240
      %v286 = vsel %vm285, %v284, %v283
      %v289 = vmul.f32 %v257, %v286
      %v290 = vmul.f32 %v258, %v284
      %292 = vst [vmem:[#allocation1] ss:$2 sm:$0xff] %v257
      %v293 = vld.sshfl [vmem:[#allocation1] sm:$0xff pattern:$0x75316420]
      %v294 = vld.sshfl [vmem:[#allocation1 + $0x8] sm:$0xff pattern:$0x75316420]
      %s299 = scalar_lea.vmem [#allocation1], 1
      %300 = vst [vmem:[%s299] ss:$2 sm:$0xff] %v275
      %s301 = scalar_lea.vmem [#allocation1], 17
      %302 = vst [vmem:[%s301] ss:$2 sm:$0xff] %v276
      %v303 = vld.sshfl [vmem:[#allocation1] sm:$0xff pattern:$0x75316420]
      %v304 = vld.sshfl [vmem:[#allocation1 + $0x8] sm:$0xff pattern:$0x75316420]
      %v305 = vld.sshfl [vmem:[#allocation1 + $0x10] sm:$0xff pattern:$0x75316420]
      %306 = vrot.lane.b32.xlu0 %v303, 113
      %v307 = vpop.permute.xlu0 %306
      %308 = vrot.lane.b32.xlu0 %v304, 113
      %v309 = vpop.permute.xlu0 %308
      %310 = vrot.lane.b32.xlu0 %v305, 113
      %v311 = vpop.permute.xlu0 %310
      %vm312 = vcmask 924672
      %v313 = vsel %vm312, %v307, %v309
      %v314 = vsel %vm312, %v309, %v311
      %318 = vst [vmem:[#allocation1] ss:$2 sm:$0xff] %v257
      %s319 = scalar_lea.vmem [#allocation1], 16
      %320 = vst [vmem:[%s319] ss:$2 sm:$0xff] %v258
      %v321 = vld.sshfl [vmem:[#allocation1] sm:$0xff pattern:$0x75316420]
      %v322 = vld.sshfl [vmem:[#allocation1 + $0x8] sm:$0xff pattern:$0x75316420]
      %v323 = vld.sshfl [vmem:[#allocation1 + $0x10] sm:$0xff pattern:$0x75316420]
      %324 = vrot.lane.b32.xlu0 %v321, 112
      %v325 = vpop.permute.xlu0 %324
      %326 = vrot.lane.b32.xlu0 %v322, 112
      %v327 = vpop.permute.xlu0 %326
      %328 = vrot.lane.b32.xlu0 %v323, 112
      %v329 = vpop.permute.xlu0 %328
      %vm330 = vcmask 916480
      %v331 = vsel %vm330, %v325, %v327
      %v332 = vsel %vm330, %v327, %v329
      %s337 = scalar_lea.vmem [#allocation1], 1
      %338 = vst [vmem:[%s337] ss:$2 sm:$0xff] %v289
      %s339 = scalar_lea.vmem [#allocation1], 17
      %340 = vst [vmem:[%s339] ss:$2 sm:$0xff] %v290
      %v341 = vld.sshfl [vmem:[#allocation1] sm:$0xff pattern:$0x75316420]
      %v342 = vld.sshfl [vmem:[#allocation1 + $0x8] sm:$0xff pattern:$0x75316420]
      %v343 = vld.sshfl [vmem:[#allocation1 + $0x10] sm:$0xff pattern:$0x75316420]
      %344 = vrot.lane.b32.xlu0 %v341, 111
      %v345 = vpop.permute.xlu0 %344
      %346 = vrot.lane.b32.xlu0 %v342, 111
      %v347 = vpop.permute.xlu0 %346
      %348 = vrot.lane.b32.xlu0 %v343, 111
      %v349 = vpop.permute.xlu0 %348
      %vm350 = vcmask 908288
      %v351 = vsel %vm350, %v345, %v347
      %v352 = vsel %vm350, %v347, %v349
      %355 = vst [vmem:[#allocation1] ss:$2 sm:$0xff] %v257
      %s356 = scalar_lea.vmem [#allocation1], 16
      %357 = vst [vmem:[%s356] ss:$2 sm:$0xff] %v258
      %v358 = vld.sshfl [vmem:[#allocation1] sm:$0xff pattern:$0x75316420]
      %v359 = vld.sshfl [vmem:[#allocation1 + $0x8] sm:$0xff pattern:$0x75316420]
      %v360 = vld.sshfl [vmem:[#allocation1 + $0x10] sm:$0xff pattern:$0x75316420]
      %361 = vrot.lane.b32.xlu0 %v358, 96
      %v362 = vpop.permute.xlu0 %361
      %363 = vrot.lane.b32.xlu0 %v359, 96
      %v364 = vpop.permute.xlu0 %363
      %365 = vrot.lane.b32.xlu0 %v360, 96
      %v366 = vpop.permute.xlu0 %365
      %vm367 = vcmask 785408
      %v368 = vsel %vm367, %v362, %v364
      %v369 = vsel %vm367, %v364, %v366
      %v372 = vsel %vm266, %v293, %v313
      %v373 = vsel %vm266, %v294, %v314
      %v374 = vsel %vm266, %v331, %v351
      %v375 = vsel %vm266, %v332, %v352
      %v376 = vsel %vm266, %v368, 0.0
      %v377 = vsel %vm266, %v369, 0.0
      %v378 = vld [vmem:[%s1] sm:$0xf]
      %v379 = vld [vmem:[%s2] sm:$0xf]
      %381 = vset.pattern.permute.xlu0 0
      %382 = vperm.xlu0 %381, %v379
      %v383 = vpop.permute.xlu0 %382
      %vm385 = vcmask 195584
      %v387 = vsel %vm385, %v378, 0
      %389 = vmatpush.msra.mxu0 0.0
      %390 = vmatpush.msra.mxu0 0.0
      %391 = vmatpush.msra.mxu0 0.0
      %392 = vmatpush.msra.mxu0 0.0
      %393 = vmatpush.msra.mxu0 0.0
      %394 = vmatpush.msra.mxu0 0.0
      %395 = vmatpush.msra.mxu0 0.0
      %396 = vmatpush.msra.mxu0 0.0
      %397 = vmatpush.msra.mxu0 0.0
      %398 = vmatpush.msra.mxu0 0.0
      %399 = vmatpush.msra.mxu0 0.0
      %400 = vmatpush.msra.mxu0 0.0
      %401 = vmatpush.msra.mxu0 0.0
      %402 = vmatpush.msra.mxu0 %v376
      %403 = vmatpush.msra.mxu0 %v374
      %404 = vmatpush.msra.mxu0 %v372
      %405 = vmatmul.f32.gmra.mxu0 %v387
      %v406 = vpop.f32.mrf.mxu0
      %v407 = vadd.f32 %v383, %v406
      %408 = vdwg.mxu0
      %409 = vmatpush.msra.mxu0 0.0
      %410 = vmatpush.msra.mxu0 0.0
      %411 = vmatpush.msra.mxu0 0.0
      %412 = vmatpush.msra.mxu0 0.0
      %413 = vmatpush.msra.mxu0 0.0
      %414 = vmatpush.msra.mxu0 0.0
      %415 = vmatpush.msra.mxu0 0.0
      %416 = vmatpush.msra.mxu0 0.0
      %417 = vmatpush.msra.mxu0 0.0
      %418 = vmatpush.msra.mxu0 0.0
      %419 = vmatpush.msra.mxu0 0.0
      %420 = vmatpush.msra.mxu0 0.0
      %421 = vmatpush.msra.mxu0 0.0
      %422 = vmatpush.msra.mxu0 %v377
      %423 = vmatpush.msra.mxu0 %v375
      %424 = vmatpush.msra.mxu0 %v373
      %425 = vmatmul.f32.gmra.mxu0 %v387
      %v426 = vpop.f32.mrf.mxu0
      %v427 = vadd.f32 %v383, %v426
      %428 = vdwg.mxu0
      %v431 = vrot.slane %v427, 4
      %v432 = vsel %vm266, %v407, %v431
      %434 = vst [vmem:[%s255] sm:$0xff] %v432
      %s435 = smul.u32 2, %s20
      %p436 = scmp.lt.s32.totalorder %s19, 1
      %s437 = scalar_select %p436, %s19, 1
      %p438 = scmp.lt.s32.totalorder %s435, 1
      %s439 = scalar_select %p438, %s435, 1
      %s440 = smul.addr %s437, 2
      %s441 = sadd.s32 %s439, %s440
      %s442 = smul.addr %s441, 4
      %s443 = scalar_lea.vmem %s4, %s442
      // Predicated region
      $region37: #{cross_conv_v1.1} parent=35 // pred_check
        %p444 = pneg %p143
      $region38: #{cross_conv_v1.1} parent=35 // pred_check_branch
        %446 = sbr.rel (%p444) target = $region40
      $region39: #{cross_conv_v1.1} parent=35 // pred_region
        %s447 = smul.u32 2, %s20
      $region40: #{cross_conv_v1.1} parent=35 // pred_fallthru
        _
    $region36: #{cross_conv_v1.1} parent=5 // pred_fallthru
      _
    %p448 = scmp.le.s32.totalorder 2, %s10
    // Predicated region
    $region41: #{cross_conv_v1.1} parent=5 // pred_check
      %p449 = pneg %p448
    $region42: #{cross_conv_v1.1} parent=5 // pred_check_branch
      %451 = sbr.rel (%p449) target = $region44
    $region43: #{cross_conv_v1.1} parent=5 // pred_region
      %s452 = ssub.s32 %s10, 2
      // Predicated region
      $region45: #{cross_conv_v1.1} parent=43 // pred_check
        %p453 = pneg %p149
      $region46: #{cross_conv_v1.1} parent=43 // pred_check_branch
        %455 = sbr.rel (%p453) target = $region48
      $region47: #{cross_conv_v1.1} parent=43 // pred_region
        %s456 = smul.u32 2, %s22
        %p457 = scmp.lt.s32.totalorder %s21, 1
        %s458 = scalar_select %p457, %s21, 1
        %p459 = scmp.lt.s32.totalorder %s456, 1
        %s460 = scalar_select %p459, %s456, 1
        %s461 = smul.addr %s458, 2
        %s462 = sadd.s32 %s460, %s461
        %s463 = smul.addr %s462, 4
        %s464 = scalar_lea.vmem %s4, %s463
      $region48: #{cross_conv_v1.1} parent=43 // pred_fallthru
        _
    $region44: #{cross_conv_v1.1} parent=5 // pred_fallthru
      _
  $region6: #{cross_conv_v1.1} parent=0 // loop_footer
    %s14 = sadd.s32 1, %s10
  $region7: #{cross_conv_v1.1} parent=0 // loop_footer_branch
    %9 = sbr.rel target = $region3
  $region8: #{cross_conv_v1.1} parent=0 // loop_exit
    _

</llo_original>
